<compile_context>
chip_gen: v7x
topology: tpu7x:2x2x1
jax: 0.10.0
libtpu: 0.0.40
codegen_flags: <defaults>
</compile_context>

<pallas_src>
import jax
import jax.numpy as jnp
from jax.experimental import pallas as pl
from jax.experimental.pallas import tpu as pltpu

IN_FEATURES = 2
OUT_FEATURES = 3


def linear_kernel(x_ref, wb_ref, o_ref):
    # x_ref:  [B, IN]            f32 in VMEM
    # wb_ref: [IN*OUT + OUT]     f32 in SMEM; wb[IN*o + k] = W[o, k],
    #                            wb[IN*OUT + o] = bias[o]
    # o_ref:  [B, OUT]           f32 in VMEM
    x = x_ref[...]
    x0 = x[:, 0:1]  # [B, 1]
    x1 = x[:, 1:2]  # [B, 1]
    # K=2 fully unrolled; weights come out of SMEM as scalars, so each output
    # column is two sreg-splat multiply-adds plus a scalar bias add — pure VPU,
    # no MXU, no XLU, no lane broadcasts.
    for o in range(OUT_FEATURES):
        w0 = wb_ref[IN_FEATURES * o + 0]
        w1 = wb_ref[IN_FEATURES * o + 1]
        b = wb_ref[IN_FEATURES * OUT_FEATURES + o]
        o_ref[:, o:o + 1] = (x0 * w0 + x1 * w1 + b).astype(o_ref.dtype)


@jax.jit
def linear_pallas(x, weight, bias):
    """y = x @ weight.T + bias  (PyTorch nn.Linear semantics)."""
    B, IN = x.shape
    OUT, IN2 = weight.shape
    assert IN == IN2 == IN_FEATURES and OUT == OUT_FEATURES, \
        "kernel unrolls K=2, OUT=3 explicitly"

    # Glue (fused under jit): flatten W (row-major per output) and bias into a
    # single 1-D f32 operand destined for SMEM.
    wb = jnp.concatenate(
        [weight.reshape(-1), bias.reshape(-1)]).astype(jnp.float32)  # [9]

    bytes_accessed = 4 * (x.size + wb.size + B * OUT)
    cost = pl.CostEstimate(
        flops=2 * B * OUT * IN + B * OUT,
        transcendentals=0,
        bytes_accessed=bytes_accessed,
    )

    return pl.pallas_call(
        linear_kernel,
        out_shape=jax.ShapeDtypeStruct((B, OUT), x.dtype),
        # Gridless: whole arrays live on-chip for the single kernel invocation.
        in_specs=[
            pl.BlockSpec(memory_space=pltpu.MemorySpace.VMEM),
            pl.BlockSpec(memory_space=pltpu.MemorySpace.SMEM),
        ],
        out_specs=pl.BlockSpec(memory_space=pltpu.MemorySpace.VMEM),
        cost_estimate=cost,
    )(x, wb)


if __name__ == "__main__":
    key = jax.random.PRNGKey(0)
    k_x, k_w, k_b = jax.random.split(key, 3)

    BATCH = 8

    # Deterministic parameter init (mimics PyTorch nn.Linear default:
    # U(-1/sqrt(in), 1/sqrt(in)) for both weight and bias).
    bound = 1.0 / jnp.sqrt(jnp.float32(IN_FEATURES))
    weight = jax.random.uniform(
        k_w, (OUT_FEATURES, IN_FEATURES), jnp.float32, minval=-bound, maxval=bound
    )
    bias = jax.random.uniform(
        k_b, (OUT_FEATURES,), jnp.float32, minval=-bound, maxval=bound
    )

    x = jax.random.normal(k_x, (BATCH, IN_FEATURES), jnp.float32)

    y = linear_pallas(x, weight, bias)
    jax.block_until_ready(y)

    # Reference check against plain JAX (same math as nn.Linear forward).
    y_ref = x @ weight.T + bias
    assert y.shape == (BATCH, OUT_FEATURES)
    assert jnp.allclose(y, y_ref, atol=1e-5, rtol=1e-5)

    print("KERNEL_OK")
</pallas_src>

<mosaic_0001>
module attributes {stable_mosaic.version = 11 : i64} {
  func.func @linear_kernel(%arg0: memref<8x2xf32, #tpu.memory_space<vmem>>, %arg1: memref<9xf32, #tpu.memory_space<smem>>, %arg2: memref<8x3xf32, #tpu.memory_space<vmem>>) attributes {dimension_semantics = [], scalar_prefetch = 0 : i64, scratch_operands = 0 : i64, tpu.core_type = #tpu.core_type<tc>} {
    %c0 = arith.constant 0 : index
    %c0_0 = arith.constant 0 : index
    %0 = vector.load %arg0[%c0, %c0_0] : memref<8x2xf32, #tpu.memory_space<vmem>>, vector<8x2xf32>
    %1 = vector.extract_strided_slice %0 {offsets = [0, 0], sizes = [8, 1], strides = [1, 1]} : vector<8x2xf32> to vector<8x1xf32>
    %2 = vector.extract_strided_slice %0 {offsets = [0, 1], sizes = [8, 1], strides = [1, 1]} : vector<8x2xf32> to vector<8x1xf32>
    %c0_1 = arith.constant 0 : index
    %3 = memref.load %arg1[%c0_1] : memref<9xf32, #tpu.memory_space<smem>>
    %c1 = arith.constant 1 : index
    %4 = memref.load %arg1[%c1] : memref<9xf32, #tpu.memory_space<smem>>
    %c6 = arith.constant 6 : index
    %5 = memref.load %arg1[%c6] : memref<9xf32, #tpu.memory_space<smem>>
    %6 = vector.broadcast %3 : f32 to vector<8x1xf32>
    %7 = arith.mulf %1, %6 : vector<8x1xf32>
    %8 = vector.broadcast %4 : f32 to vector<8x1xf32>
    %9 = arith.mulf %2, %8 : vector<8x1xf32>
    %10 = arith.addf %7, %9 : vector<8x1xf32>
    %11 = vector.broadcast %5 : f32 to vector<8x1xf32>
    %12 = arith.addf %10, %11 : vector<8x1xf32>
    %c0_2 = arith.constant 0 : index
    %c0_3 = arith.constant 0 : index
    %13 = vector.load %arg2[%c0_2, %c0_3] : memref<8x3xf32, #tpu.memory_space<vmem>>, vector<8x1xf32>
    tpu.vector_store %arg2[%c0_2, %c0_3], %12 {strides = array<i32>} : memref<8x3xf32, #tpu.memory_space<vmem>>, vector<8x1xf32>,
    %c2 = arith.constant 2 : index
    %14 = memref.load %arg1[%c2] : memref<9xf32, #tpu.memory_space<smem>>
    %c3 = arith.constant 3 : index
    %15 = memref.load %arg1[%c3] : memref<9xf32, #tpu.memory_space<smem>>
    %c7 = arith.constant 7 : index
    %16 = memref.load %arg1[%c7] : memref<9xf32, #tpu.memory_space<smem>>
    %17 = vector.broadcast %14 : f32 to vector<8x1xf32>
    %18 = arith.mulf %1, %17 : vector<8x1xf32>
    %19 = vector.broadcast %15 : f32 to vector<8x1xf32>
    %20 = arith.mulf %2, %19 : vector<8x1xf32>
    %21 = arith.addf %18, %20 : vector<8x1xf32>
    %22 = vector.broadcast %16 : f32 to vector<8x1xf32>
    %23 = arith.addf %21, %22 : vector<8x1xf32>
    %c0_4 = arith.constant 0 : index
    %c1_5 = arith.constant 1 : index
    %24 = vector.load %arg2[%c0_4, %c1_5] : memref<8x3xf32, #tpu.memory_space<vmem>>, vector<8x1xf32>
    tpu.vector_store %arg2[%c0_4, %c1_5], %23 {strides = array<i32>} : memref<8x3xf32, #tpu.memory_space<vmem>>, vector<8x1xf32>,
    %c4 = arith.constant 4 : index
    %25 = memref.load %arg1[%c4] : memref<9xf32, #tpu.memory_space<smem>>
    %c5 = arith.constant 5 : index
    %26 = memref.load %arg1[%c5] : memref<9xf32, #tpu.memory_space<smem>>
    %c8 = arith.constant 8 : index
    %27 = memref.load %arg1[%c8] : memref<9xf32, #tpu.memory_space<smem>>
    %28 = vector.broadcast %25 : f32 to vector<8x1xf32>
    %29 = arith.mulf %1, %28 : vector<8x1xf32>
    %30 = vector.broadcast %26 : f32 to vector<8x1xf32>
    %31 = arith.mulf %2, %30 : vector<8x1xf32>
    %32 = arith.addf %29, %31 : vector<8x1xf32>
    %33 = vector.broadcast %27 : f32 to vector<8x1xf32>
    %34 = arith.addf %32, %33 : vector<8x1xf32>
    %c0_6 = arith.constant 0 : index
    %c2_7 = arith.constant 2 : index
    %35 = vector.load %arg2[%c0_6, %c2_7] : memref<8x3xf32, #tpu.memory_space<vmem>>, vector<8x1xf32>
    tpu.vector_store %arg2[%c0_6, %c2_7], %34 {strides = array<i32>} : memref<8x3xf32, #tpu.memory_space<vmem>>, vector<8x1xf32>,
    return
  }
}

</mosaic_0001>

<llo_original>
// kernel: linear_pallas.1
$region0: #{linear_pallas.1}
  #allocation0 [shape = 'u32[]', space=smem, size = 0x4, offset = 0x4, fixed_abs, tag = 'smem constant byte address 0x4 - core index']
  #allocation1 [shape = 'u32[144,128]{1,0:T(1,128)}', space=vmem, size = 0x12000, scoped, tag = 'internal scratch']
  %s0 = inlined_call_operand.vmem [shape: f32[8,2], index: 0, kind: input, shape index: {}]
  %s1 = inlined_call_operand.vmem [shape: f32[9], index: 1, kind: input, shape index: {}]
  %s2 = inlined_call_operand.vmem [shape: f32[8,3], index: 2, kind: output, shape index: {}]
  %s3 = sld [smem:[#allocation0]]
  $region22: #{linear_pallas.1} parent=0
    _
  %s5 = ssub.s32 1, %s3
  %s6 = scalar_select 0, %s5, %s3
  $region1: #{linear_pallas.1} parent=0
    #allocation2 [shape = 'u8[512]{0}', space=smem, size = 0x200, scoped, tag = 'input window, operand 1, single buffered']
    #allocation3 [shape = 's32[1]{0}', space=sflag, size = 0x4, scoped, tag = 'scoped memory for linear_pallas.1']
    %7 = vsyncpa [#allocation3], 0
    // Predicated region
    $region2: #{linear_pallas.1} parent=1 // pred_check
      _
    $region3: #{linear_pallas.1} parent=1 // pred_check_branch
      %9 = sbr.rel (0) target = $region5
    $region4: #{linear_pallas.1} parent=1 // pred_region
      _
    $region5: #{linear_pallas.1} parent=1 // pred_fallthru
      _
    // Predicated region
    $region6: #{linear_pallas.1} parent=1 // pred_check
      _
    $region7: #{linear_pallas.1} parent=1 // pred_check_branch
      %11 = sbr.rel (0) target = $region9
    $region8: #{linear_pallas.1} parent=1 // pred_region
      %s13 = ssub.s32 16, 16
      %14 = vsyncadd [#allocation3], %s13
      %s16 = sshll.u32 %s1, 4
      %s17 = int_to_ptr.vmem [resolvable:$true] %s16
      %19 = dma.vmem_to_smem %s17, 16, [#allocation2], [#allocation3]
    $region9: #{linear_pallas.1} parent=1 // pred_fallthru
      _
    // Predicated region
    $region10: #{linear_pallas.1} parent=1 // pred_check
      _
    $region11: #{linear_pallas.1} parent=1 // pred_check_branch
      %21 = sbr.rel (0) target = $region13
    $region12: #{linear_pallas.1} parent=1 // pred_region
      %22 = dma.done [#allocation3], 16
    $region13: #{linear_pallas.1} parent=1 // pred_fallthru
      _
    %23 = sfence
    %v24 = vld [vmem:[%s0] sm:$0xff]
    %s25 = sld [smem:[#allocation2]]
    %s26 = sld [smem:[#allocation2 + $0x1]]
    %s27 = sld [smem:[#allocation2 + $0x6]]
    %v28 = vstv %s25
    %v29 = vmul.f32 %v24, %v28
    %v30 = vstv %s26
    %v31 = vmul.f32 %v24, %v30
    %33 = vrot.lane.b32.xlu0 %v31, 127
    %v34 = vpop.permute.xlu0 %33
    %v36 = vadd.f32 %v29, %v34
    %v37 = vstv %s27
    %v38 = vadd.f32 %v36, %v37
    %vm39 = vcmask 7168
    %40 = vst.msk [vmem:[%s2] sm:$0xff] %vm39, %v38
    %s41 = sld [smem:[#allocation2 + $0x2]]
    %s42 = sld [smem:[#allocation2 + $0x3]]
    %s43 = sld [smem:[#allocation2 + $0x7]]
    %v44 = vstv %s41
    %v45 = vmul.f32 %v24, %v44
    %v46 = vstv %s42
    %v47 = vmul.f32 %v24, %v46
    %49 = vrot.lane.b32.xlu0 %v47, 127
    %v50 = vpop.permute.xlu0 %49
    %v52 = vadd.f32 %v45, %v50
    %v53 = vstv %s43
    %v54 = vadd.f32 %v52, %v53
    %56 = vrot.lane.b32.xlu0 %v54, 1
    %v57 = vpop.permute.xlu0 %56
    %vm59 = vcmask 15368
    %60 = vst.msk [vmem:[%s2] sm:$0xff] %vm59, %v57
    %s61 = sld [smem:[#allocation2 + $0x4]]
    %s62 = sld [smem:[#allocation2 + $0x5]]
    %s63 = sld [smem:[#allocation2 + $0x8]]
    %v64 = vstv %s61
    %v65 = vmul.f32 %v24, %v64
    %v66 = vstv %s62
    %v67 = vmul.f32 %v24, %v66
    %69 = vrot.lane.b32.xlu0 %v67, 127
    %v70 = vpop.permute.xlu0 %69
    %v72 = vadd.f32 %v65, %v70
    %v73 = vstv %s63
    %v74 = vadd.f32 %v72, %v73
    %76 = vrot.lane.b32.xlu0 %v74, 2
    %v77 = vpop.permute.xlu0 %76
    %vm79 = vcmask 23568
    %80 = vst.msk [vmem:[%s2] sm:$0xff] %vm79, %v77
    // Predicated region
    $region14: #{linear_pallas.1} parent=1 // pred_check
      _
    $region15: #{linear_pallas.1} parent=1 // pred_check_branch
      %82 = sbr.rel (0) target = $region17
    $region16: #{linear_pallas.1} parent=1 // pred_region
      _
    $region17: #{linear_pallas.1} parent=1 // pred_fallthru
      _
    // Predicated region
    $region18: #{linear_pallas.1} parent=1 // pred_check
      _
    $region19: #{linear_pallas.1} parent=1 // pred_check_branch
      %84 = sbr.rel (0) target = $region21
    $region20: #{linear_pallas.1} parent=1 // pred_region
      _
    $region21: #{linear_pallas.1} parent=1 // pred_fallthru
      _
    %85 = vsyncpa [#allocation3], 1

</llo_original>
